<compile_context>
chip_gen: v7x
topology: tpu7x:2x2x1
jax: 0.10.0
libtpu: 0.0.40
codegen_flags: <defaults>
</compile_context>

<pallas_src>
import functools

import jax
import jax.numpy as jnp
from jax.experimental import pallas as pl
from jax.experimental.pallas import tpu as pltpu


def _focal_bce_kernel(pw_ref, x_ref, t_ref, out_ref, acc_ref, *,
                      gamma, n_rows, tile_rows, total_elems, reduction,
                      needs_mask):
    j = pl.program_id(0)
    num_tiles = pl.num_programs(0)

    @pl.when(j == 0)
    def _init():
        acc_ref[...] = jnp.zeros_like(acc_ref)

    x = x_ref[...].astype(jnp.float32)
    t = t_ref[...].astype(jnp.float32)
    pw = pw_ref[0]

    # Numerically stable softplus(-x) = log(1 + exp(-x))
    sp = jnp.log1p(jnp.exp(-jnp.abs(x))) + jnp.maximum(-x, 0.0)
    # BCE-with-logits, pos_weight on the positive (y) term:
    #   -[pw * y * log(sigmoid(x)) + (1 - y) * log(1 - sigmoid(x))]
    bce = pw * t * sp + (1.0 - t) * (x + sp)

    pt = jnp.exp(-bce)
    one_m_pt = 1.0 - pt

    # Focal term: repeated multiply for small integer gamma (avoids exp/log pow).
    if float(gamma) == int(gamma) and 0 <= int(gamma) <= 4:
        g = int(gamma)
        if g == 0:
            focal = jnp.ones_like(one_m_pt)
        else:
            focal = one_m_pt
            for _ in range(g - 1):
                focal = focal * one_m_pt
    else:
        focal = one_m_pt ** jnp.float32(gamma)

    loss = focal * bce

    if needs_mask:
        # Zero out padded rows of the ragged last tile (garbage data past N).
        row_ids = (jax.lax.broadcasted_iota(jnp.int32, loss.shape, 0)
                   + j * tile_rows)
        loss = jnp.where(row_ids < n_rows, loss, 0.0)

    # Fold (tile_rows, D) -> (8, D) with pure VPU adds (sublane split at a
    # multiple of 8 keeps the native (8,128) tiling; no lane crossing).
    d = loss.shape[-1]
    acc_ref[...] += jnp.sum(loss.reshape(tile_rows // 8, 8, d), axis=0)

    @pl.when(j == num_tiles - 1)
    def _finalize():
        total = jnp.sum(acc_ref[...])
        if reduction == "mean":
            out_ref[0, 0] = total / jnp.float32(total_elems)
        else:  # "sum"
            out_ref[0, 0] = total


def _pick_tile_rows(n_rows, d, pair_itemsize,
                    target_pair_bytes=8 * 1024 * 1024):
    """Largest multiple-of-8 row tile so that (x tile + t tile) <= budget."""
    padded_n = ((n_rows + 7) // 8) * 8
    rows = target_pair_bytes // max(1, d * pair_itemsize)
    rows = max(8, (rows // 8) * 8)
    return int(min(rows, padded_n))


def combined_focal_bce_loss(inputs, targets, gamma=2.0, alpha=None,
                            reduction="mean", eps=1e-7, tile_rows=None):
    # TODO(synk): reduction='none' (elementwise loss output) is not supported by
    # this scalar-reducing kernel; only 'mean' / 'sum'.
    assert reduction in ("mean", "sum")
    assert inputs.shape == targets.shape

    n0 = inputs.shape[0]
    # Flatten trailing dims; preserves the module's size(0)-based num_neg and
    # the elementwise mean/sum over all elements.
    x2 = inputs.reshape(n0, -1)
    t2 = targets.reshape(n0, -1)
    n_rows, d = x2.shape
    total_elems = n_rows * d

    # pos_weight computed once outside the kernel (single XLA reduce), fed to
    # the kernel as a runtime scalar in SMEM.
    if alpha is None:
        num_pos = jnp.sum(targets.astype(jnp.float32)) + jnp.float32(eps)
        num_neg = jnp.float32(n0) - num_pos + jnp.float32(eps)
        pos_weight = num_neg / num_pos
    else:
        pos_weight = jnp.float32(alpha)
    pw_arr = jnp.asarray(pos_weight, jnp.float32).reshape(1)

    if tile_rows is None:
        pair_itemsize = x2.dtype.itemsize + t2.dtype.itemsize
        tile_rows = _pick_tile_rows(n_rows, d, pair_itemsize)
    assert tile_rows % 8 == 0

    num_tiles = pl.cdiv(n_rows, tile_rows)
    needs_mask = (n_rows % tile_rows) != 0

    kernel = functools.partial(
        _focal_bce_kernel,
        gamma=float(gamma),
        n_rows=n_rows,
        tile_rows=tile_rows,
        total_elems=float(total_elems),
        reduction=reduction,
        needs_mask=needs_mask,
    )

    out = pl.pallas_call(
        kernel,
        out_shape=jax.ShapeDtypeStruct((1, 1), jnp.float32),
        grid_spec=pltpu.PrefetchScalarGridSpec(
            num_scalar_prefetch=0,
            grid=(num_tiles,),
            in_specs=[
                pl.BlockSpec(memory_space=pltpu.SMEM),            # pos_weight (1,)
                pl.BlockSpec((tile_rows, d), lambda j: (j, 0)),   # logits
                pl.BlockSpec((tile_rows, d), lambda j: (j, 0)),   # targets
            ],
            out_specs=pl.BlockSpec((1, 1), lambda j: (0, 0),
                                   memory_space=pltpu.SMEM),
            scratch_shapes=[
                pltpu.VMEM((8, d), jnp.float32),   # running vector loss accum
            ],
        ),
        compiler_params=pltpu.CompilerParams(
            dimension_semantics=("arbitrary",),
            vmem_limit_bytes=40 * 1024 * 1024,
        ),
    )(pw_arr, x2, t2)
    return out[0, 0]


def _reference_loss(inputs, targets, gamma=2.0, alpha=None,
                    reduction="mean", eps=1e-7):
    """Pure-JAX reference mirroring the PyTorch module."""
    x = inputs.astype(jnp.float32)
    t = targets.astype(jnp.float32)
    if alpha is None:
        num_pos = jnp.sum(t) + eps
        num_neg = t.shape[0] - num_pos + eps
        pw = num_neg / num_pos
    else:
        pw = jnp.float32(alpha)
    sp = jnp.log1p(jnp.exp(-jnp.abs(x))) + jnp.maximum(-x, 0.0)
    bce = pw * t * sp + (1.0 - t) * (x + sp)
    pt = jnp.exp(-bce)
    loss = (1.0 - pt) ** gamma * bce
    if reduction == "mean":
        return jnp.mean(loss)
    return jnp.sum(loss)


if __name__ == "__main__":
    key = jax.random.PRNGKey(0)
    k_x, k_t = jax.random.split(key)

    N, D = 48, 512  # small demo shape; N = "batch" dim used in size(0)
    inputs = jax.random.normal(k_x, (N, D), dtype=jnp.float32) * 2.0
    # Imbalanced binary targets (float 0/1), ~10% positives.
    targets = (jax.random.uniform(k_t, (N, D)) < 0.1).astype(jnp.float32)

    # 1) Default config: auto tile (single large tile), dynamic pos_weight, mean.
    out = combined_focal_bce_loss(inputs, targets, gamma=2.0,
                                  alpha=None, reduction="mean")
    out = jax.block_until_ready(out)
    ref = _reference_loss(inputs, targets, gamma=2.0,
                          alpha=None, reduction="mean")
    assert jnp.allclose(out, ref, rtol=1e-4, atol=1e-6), (out, ref)

    # 2) Forced small tiles with a ragged last tile (exercises masking + accum).
    out2 = combined_focal_bce_loss(inputs, targets, gamma=2.0,
                                   alpha=None, reduction="mean", tile_rows=32)
    out2 = jax.block_until_ready(out2)
    assert jnp.allclose(out2, ref, rtol=1e-4, atol=1e-6), (out2, ref)

    # 3) Fixed alpha, sum reduction.
    out3 = combined_focal_bce_loss(inputs, targets, gamma=2.0,
                                   alpha=0.75, reduction="sum")
    out3 = jax.block_until_ready(out3)
    ref3 = _reference_loss(inputs, targets, gamma=2.0,
                           alpha=0.75, reduction="sum")
    assert jnp.allclose(out3, ref3, rtol=1e-4, atol=1e-5), (out3, ref3)

    print("KERNEL_OK")
</pallas_src>

<mosaic_0001>
module attributes {stable_mosaic.version = 11 : i64} {
  func.func @_focal_bce_kernel(%arg0: i32, %arg1: memref<1xf32, #tpu.memory_space<smem>>, %arg2: memref<48x512xf32, #tpu.memory_space<vmem>>, %arg3: memref<48x512xf32, #tpu.memory_space<vmem>>, %arg4: memref<1x1xf32, #tpu.memory_space<smem>>, %arg5: memref<8x512xf32, #tpu.memory_space<vmem>>) attributes {dimension_semantics = [#tpu.dimension_semantics<arbitrary>], iteration_bounds = array<i64: 1>, scalar_prefetch = 0 : i64, scratch_operands = 1 : i64, tpu.core_type = #tpu.core_type<tc>, window_params = [{transform_indices = @transform_0, window_bounds = array<i64: 1>}, {transform_indices = @transform_1, window_bounds = array<i64: 48, 512>}, {transform_indices = @transform_2, window_bounds = array<i64: 48, 512>}, {transform_indices = @transform_3, window_bounds = array<i64: 1, 1>}]} {
    %c0_i32 = arith.constant 0 : i32
    %0 = arith.cmpi eq, %arg0, %c0_i32 : i32
    %1 = arith.extui %0 : i1 to i32
    %c0_i32_0 = arith.constant 0 : i32
    %2 = arith.cmpi ne, %1, %c0_i32_0 : i32
    scf.if %2 {
      %cst_17 = arith.constant 0.000000e+00 : f32
      %39 = vector.broadcast %cst_17 : f32 to vector<8x512xf32>
      %c0_18 = arith.constant 0 : index
      %c0_19 = arith.constant 0 : index
      %40 = vector.load %arg5[%c0_18, %c0_19] : memref<8x512xf32, #tpu.memory_space<vmem>>, vector<8x512xf32>
      tpu.vector_store %arg5[%c0_18, %c0_19], %39 {strides = array<i32>} : memref<8x512xf32, #tpu.memory_space<vmem>>, vector<8x512xf32>,
    } else {
    }
    %c0 = arith.constant 0 : index
    %c0_1 = arith.constant 0 : index
    %3 = vector.load %arg2[%c0, %c0_1] : memref<48x512xf32, #tpu.memory_space<vmem>>, vector<48x512xf32>
    %c0_2 = arith.constant 0 : index
    %c0_3 = arith.constant 0 : index
    %4 = vector.load %arg3[%c0_2, %c0_3] : memref<48x512xf32, #tpu.memory_space<vmem>>, vector<48x512xf32>
    %c0_4 = arith.constant 0 : index
    %5 = memref.load %arg1[%c0_4] : memref<1xf32, #tpu.memory_space<smem>>
    %6 = math.absf %3 : vector<48x512xf32>
    %cst = arith.constant 0.000000e+00 : f32
    %7 = vector.broadcast %cst : f32 to vector<48x512xf32>
    %8 = arith.subf %7, %6 : vector<48x512xf32>
    %9 = math.exp %8 : vector<48x512xf32>
    %10 = math.log1p %9 : vector<48x512xf32>
    %cst_5 = arith.constant 0.000000e+00 : f32
    %11 = vector.broadcast %cst_5 : f32 to vector<48x512xf32>
    %12 = arith.subf %11, %3 : vector<48x512xf32>
    %cst_6 = arith.constant 0.000000e+00 : f32
    %13 = vector.broadcast %cst_6 : f32 to vector<48x512xf32>
    %14 = arith.maximumf %12, %13 : vector<48x512xf32>
    %15 = arith.addf %10, %14 : vector<48x512xf32>
    %16 = vector.broadcast %5 : f32 to vector<48x512xf32>
    %17 = arith.mulf %16, %4 : vector<48x512xf32>
    %18 = arith.mulf %17, %15 : vector<48x512xf32>
    %cst_7 = arith.constant 1.000000e+00 : f32
    %19 = vector.broadcast %cst_7 : f32 to vector<48x512xf32>
    %20 = arith.subf %19, %4 : vector<48x512xf32>
    %21 = arith.addf %3, %15 : vector<48x512xf32>
    %22 = arith.mulf %20, %21 : vector<48x512xf32>
    %23 = arith.addf %18, %22 : vector<48x512xf32>
    %cst_8 = arith.constant 0.000000e+00 : f32
    %24 = vector.broadcast %cst_8 : f32 to vector<48x512xf32>
    %25 = arith.subf %24, %23 : vector<48x512xf32>
    %26 = math.exp %25 : vector<48x512xf32>
    %cst_9 = arith.constant 1.000000e+00 : f32
    %27 = vector.broadcast %cst_9 : f32 to vector<48x512xf32>
    %28 = arith.subf %27, %26 : vector<48x512xf32>
    %29 = arith.mulf %28, %28 : vector<48x512xf32>
    %30 = arith.mulf %29, %23 : vector<48x512xf32>
    %c0_10 = arith.constant 0 : index
    %c0_11 = arith.constant 0 : index
    %31 = vector.load %arg5[%c0_10, %c0_11] : memref<8x512xf32, #tpu.memory_space<vmem>>, vector<8x512xf32>
    %32 = vector.shape_cast %30 : vector<48x512xf32> to vector<6x8x512xf32>
    %cst_12 = arith.constant dense<0.000000e+00> : vector<8x512xf32>
    %33 = vector.multi_reduction <add>, %32, %cst_12 [0] : vector<6x8x512xf32> to vector<8x512xf32>
    %34 = arith.addf %31, %33 : vector<8x512xf32>
    %c0_13 = arith.constant 0 : index
    %c0_14 = arith.constant 0 : index
    %35 = vector.load %arg5[%c0_13, %c0_14] : memref<8x512xf32, #tpu.memory_space<vmem>>, vector<8x512xf32>
    tpu.vector_store %arg5[%c0_13, %c0_14], %34 {strides = array<i32>} : memref<8x512xf32, #tpu.memory_space<vmem>>, vector<8x512xf32>,
    %c0_i32_15 = arith.constant 0 : i32
    %36 = arith.cmpi eq, %arg0, %c0_i32_15 : i32
    %37 = arith.extui %36 : i1 to i32
    %c0_i32_16 = arith.constant 0 : i32
    %38 = arith.cmpi ne, %37, %c0_i32_16 : i32
    scf.if %38 {
      %c0_17 = arith.constant 0 : index
      %c0_18 = arith.constant 0 : index
      %39 = vector.load %arg5[%c0_17, %c0_18] : memref<8x512xf32, #tpu.memory_space<vmem>>, vector<8x512xf32>
      %40 = vector.shape_cast %39 : vector<8x512xf32> to vector<1x8x512xf32>
      %cst_19 = arith.constant dense<0.000000e+00> : vector<1xf32>
      %41 = vector.multi_reduction <add>, %40, %cst_19 [1, 2] : vector<1x8x512xf32> to vector<1xf32>
      %42 = vector.shape_cast %41 : vector<1xf32> to vector<1x1x1xf32>
      %43 = vector.extract %42[0, 0, 0] : f32 from vector<1x1x1xf32>
      %cst_20 = arith.constant 2.457600e+04 : f32
      %44 = arith.divf %43, %cst_20 : f32
      %c0_21 = arith.constant 0 : index
      %c0_22 = arith.constant 0 : index
      %45 = memref.load %arg4[%c0_21, %c0_22] : memref<1x1xf32, #tpu.memory_space<smem>>
      memref.store %44, %arg4[%c0_21, %c0_22] : memref<1x1xf32, #tpu.memory_space<smem>>
    } else {
    }
    return
  }
  func.func @transform_0(%arg0: i32) -> i32 {
    %c0_i32 = arith.constant 0 : i32
    %c0_i32_0 = arith.constant 0 : i32
    return %c0_i32 : i32
  }
  func.func @transform_1(%arg0: i32) -> (i32, i32) {
    %c0_i32 = arith.constant 0 : i32
    %c0_i32_0 = arith.constant 0 : i32
    return %arg0, %c0_i32 : i32, i32
  }
  func.func @transform_2(%arg0: i32) -> (i32, i32) {
    %c0_i32 = arith.constant 0 : i32
    %c0_i32_0 = arith.constant 0 : i32
    return %arg0, %c0_i32 : i32, i32
  }
  func.func @transform_3(%arg0: i32) -> (i32, i32) {
    %c0_i32 = arith.constant 0 : i32
    %c0_i32_0 = arith.constant 0 : i32
    %c0_i32_1 = arith.constant 0 : i32
    return %c0_i32, %c0_i32_0 : i32, i32
  }
}

</mosaic_0001>

<llo_original>
// kernel: tpu_custom_call.1
$region0: #{tpu_custom_call.1}
  #allocation0 [shape = 'u32[]', space=smem, size = 0x4, offset = 0x4, fixed_abs, tag = 'smem constant byte address 0x4 - core index']
  #allocation1 [shape = 'u32[144,128]{1,0:T(1,128)}', space=vmem, size = 0x12000, scoped, tag = 'internal scratch']
  #allocation2 [shape = 'f32[8,512]{1,0:T(8,128)}', space=vmem, size = 0x4000, scoped, tag = 'scratch operand']
  #allocation3 [shape = 'f32[1]{0:T(128)S(6)}', space=smem, size = 0x200, scoped, tag = 'scoped memory for tpu_custom_call.1']
  %s0 = inlined_call_operand.<no memory space> [shape: f32[1], index: 0, kind: input, shape index: {}]
  %s1 = inlined_call_operand.hbm [shape: f32[48,512], index: 1, kind: input, shape index: {}]
  %s2 = inlined_call_operand.hbm [shape: f32[48,512], index: 2, kind: input, shape index: {}]
  %s3 = inlined_call_operand.hbm [shape: f32[1,1], index: 3, kind: output, shape index: {}]
  %s4 = sld [smem:[#allocation0]]
  $region38: #{tpu_custom_call.1} parent=0
    _
  %s6 = ssub.s32 1, %s4
  %s7 = scalar_select 0, %s6, %s4
  %8 = sst [smem:[#allocation3]] %s0
  $region1: #{tpu_custom_call.1} parent=0
    #allocation4 [shape = 'u8[98304]{0}', space=vmem, size = 0x18000, scoped, tag = 'input window, operand 1, single buffered']
    #allocation5 [shape = 's32[1]{0}', space=sflag, size = 0x4, scoped, tag = 'scoped memory for tpu_custom_call.1']
    #allocation6 [shape = 's32[1]{0}', space=sflag, size = 0x4, scoped, tag = 'scoped memory for tpu_custom_call.1']
    #allocation7 [shape = 'u8[98304]{0}', space=vmem, size = 0x18000, scoped, tag = 'input window, operand 2, single buffered']
    #allocation8 [shape = 's32[1]{0}', space=sflag, size = 0x4, scoped, tag = 'scoped memory for tpu_custom_call.1']
    #allocation9 [shape = 'u8[512]{0}', space=smem, size = 0x200, scoped, tag = 'output window, operand 0, single buffered']
    %9 = vsyncpa [#allocation5], 0
    %10 = vsyncpa [#allocation8], 0
    %11 = vsyncpa [#allocation6], 0
    // Predicated region
    $region2: #{tpu_custom_call.1} parent=1 // pred_check
      _
    $region3: #{tpu_custom_call.1} parent=1 // pred_check_branch
      %13 = sbr.rel (0) target = $region5
    $region4: #{tpu_custom_call.1} parent=1 // pred_region
      _
    $region5: #{tpu_custom_call.1} parent=1 // pred_fallthru
      _
    // Predicated region
    $region6: #{tpu_custom_call.1} parent=1 // pred_check
      _
    $region7: #{tpu_custom_call.1} parent=1 // pred_check_branch
      %15 = sbr.rel (0) target = $region9
    $region8: #{tpu_custom_call.1} parent=1 // pred_region
      %s17 = ssub.s32 3072, 3072
      %18 = vsyncadd [#allocation5], %s17
      %s19 = sshll.u32 [#allocation4], 4
      %s20 = int_to_ptr.vmem [resolvable:$true] %s19
      %25 = dma.hbm_to_vmem [thread:$0]  %s1, 3072, %s20, [#allocation5], 512, 512, 32
    $region9: #{tpu_custom_call.1} parent=1 // pred_fallthru
      _
    // Predicated region
    $region10: #{tpu_custom_call.1} parent=1 // pred_check
      _
    $region11: #{tpu_custom_call.1} parent=1 // pred_check_branch
      %27 = sbr.rel (0) target = $region13
    $region12: #{tpu_custom_call.1} parent=1 // pred_region
      %s29 = ssub.s32 3072, 3072
      %30 = vsyncadd [#allocation8], %s29
      %s31 = sshll.u32 [#allocation7], 4
      %s32 = int_to_ptr.vmem [resolvable:$true] %s31
      %37 = dma.hbm_to_vmem [thread:$0]  %s2, 3072, %s32, [#allocation8], 512, 512, 32
    $region13: #{tpu_custom_call.1} parent=1 // pred_fallthru
      _
    // Predicated region
    $region14: #{tpu_custom_call.1} parent=1 // pred_check
      _
    $region15: #{tpu_custom_call.1} parent=1 // pred_check_branch
      %39 = sbr.rel (0) target = $region17
    $region16: #{tpu_custom_call.1} parent=1 // pred_region
      %40 = dma.done [#allocation5], 3072
    $region17: #{tpu_custom_call.1} parent=1 // pred_fallthru
      _
    // Predicated region
    $region18: #{tpu_custom_call.1} parent=1 // pred_check
      _
    $region19: #{tpu_custom_call.1} parent=1 // pred_check_branch
      %42 = sbr.rel (0) target = $region21
    $region20: #{tpu_custom_call.1} parent=1 // pred_region
      %43 = dma.done [#allocation8], 3072
    $region21: #{tpu_custom_call.1} parent=1 // pred_fallthru
      _
    %p44 = scmp.eq.s32.totalorder 0, 0
    // Predicated region
    $region22: #{tpu_custom_call.1} parent=1 // pred_check
      %p45 = pneg %p44
    $region23: #{tpu_custom_call.1} parent=1 // pred_check_branch
      %47 = sbr.rel (%p45) target = $region25
    $region24: #{tpu_custom_call.1} parent=1 // pred_region
      %48 = vst [vmem:[#allocation2] sm:$0xff] 0.0
      %49 = vst [vmem:[#allocation2 + $0x8] sm:$0xff] 0.0
      %50 = vst [vmem:[#allocation2 + $0x10] sm:$0xff] 0.0
      %51 = vst [vmem:[#allocation2 + $0x18] sm:$0xff] 0.0
    $region25: #{tpu_custom_call.1} parent=1 // pred_fallthru
      _
    %v52 = vld [vmem:[#allocation4] sm:$0xff]
    %v53 = vld [vmem:[#allocation4 + $0x8] sm:$0xff]
    %v54 = vld [vmem:[#allocation4 + $0x10] sm:$0xff]
    %v55 = vld [vmem:[#allocation4 + $0x18] sm:$0xff]
    %v56 = vld [vmem:[#allocation4 + $0x20] sm:$0xff]
    %v57 = vld [vmem:[#allocation4 + $0x28] sm:$0xff]
    %v58 = vld [vmem:[#allocation4 + $0x30] sm:$0xff]
    %v59 = vld [vmem:[#allocation4 + $0x38] sm:$0xff]
    %v60 = vld [vmem:[#allocation4 + $0x40] sm:$0xff]
    %v61 = vld [vmem:[#allocation4 + $0x48] sm:$0xff]
    %v62 = vld [vmem:[#allocation4 + $0x50] sm:$0xff]
    %v63 = vld [vmem:[#allocation4 + $0x58] sm:$0xff]
    %v64 = vld [vmem:[#allocation4 + $0x60] sm:$0xff]
    %v65 = vld [vmem:[#allocation4 + $0x68] sm:$0xff]
    %v66 = vld [vmem:[#allocation4 + $0x70] sm:$0xff]
    %v67 = vld [vmem:[#allocation4 + $0x78] sm:$0xff]
    %v68 = vld [vmem:[#allocation4 + $0x80] sm:$0xff]
    %v69 = vld [vmem:[#allocation4 + $0x88] sm:$0xff]
    %v70 = vld [vmem:[#allocation4 + $0x90] sm:$0xff]
    %v71 = vld [vmem:[#allocation4 + $0x98] sm:$0xff]
    %v72 = vld [vmem:[#allocation4 + $0xa0] sm:$0xff]
    %v73 = vld [vmem:[#allocation4 + $0xa8] sm:$0xff]
    %v74 = vld [vmem:[#allocation4 + $0xb0] sm:$0xff]
    %v75 = vld [vmem:[#allocation4 + $0xb8] sm:$0xff]
    %v76 = vld [vmem:[#allocation7] sm:$0xff]
    %v77 = vld [vmem:[#allocation7 + $0x8] sm:$0xff]
    %v78 = vld [vmem:[#allocation7 + $0x10] sm:$0xff]
    %v79 = vld [vmem:[#allocation7 + $0x18] sm:$0xff]
    %v80 = vld [vmem:[#allocation7 + $0x20] sm:$0xff]
    %v81 = vld [vmem:[#allocation7 + $0x28] sm:$0xff]
    %v82 = vld [vmem:[#allocation7 + $0x30] sm:$0xff]
    %v83 = vld [vmem:[#allocation7 + $0x38] sm:$0xff]
    %v84 = vld [vmem:[#allocation7 + $0x40] sm:$0xff]
    %v85 = vld [vmem:[#allocation7 + $0x48] sm:$0xff]
    %v86 = vld [vmem:[#allocation7 + $0x50] sm:$0xff]
    %v87 = vld [vmem:[#allocation7 + $0x58] sm:$0xff]
    %v88 = vld [vmem:[#allocation7 + $0x60] sm:$0xff]
    %v89 = vld [vmem:[#allocation7 + $0x68] sm:$0xff]
    %v90 = vld [vmem:[#allocation7 + $0x70] sm:$0xff]
    %v91 = vld [vmem:[#allocation7 + $0x78] sm:$0xff]
    %v92 = vld [vmem:[#allocation7 + $0x80] sm:$0xff]
    %v93 = vld [vmem:[#allocation7 + $0x88] sm:$0xff]
    %v94 = vld [vmem:[#allocation7 + $0x90] sm:$0xff]
    %v95 = vld [vmem:[#allocation7 + $0x98] sm:$0xff]
    %v96 = vld [vmem:[#allocation7 + $0xa0] sm:$0xff]
    %v97 = vld [vmem:[#allocation7 + $0xa8] sm:$0xff]
    %v98 = vld [vmem:[#allocation7 + $0xb0] sm:$0xff]
    %v99 = vld [vmem:[#allocation7 + $0xb8] sm:$0xff]
    %s100 = sld [smem:[#allocation3]]
    %v101 = vand.u32 2147483647, %v52
    %v102 = vand.u32 2147483647, %v53
    %v103 = vand.u32 2147483647, %v54
    %v104 = vand.u32 2147483647, %v55
    %v105 = vand.u32 2147483647, %v56
    %v106 = vand.u32 2147483647, %v57
    %v107 = vand.u32 2147483647, %v58
    %v108 = vand.u32 2147483647, %v59
    %v109 = vand.u32 2147483647, %v60
    %v110 = vand.u32 2147483647, %v61
    %v111 = vand.u32 2147483647, %v62
    %v112 = vand.u32 2147483647, %v63
    %v113 = vand.u32 2147483647, %v64
    %v114 = vand.u32 2147483647, %v65
    %v115 = vand.u32 2147483647, %v66
    %v116 = vand.u32 2147483647, %v67
    %v117 = vand.u32 2147483647, %v68
    %v118 = vand.u32 2147483647, %v69
    %v119 = vand.u32 2147483647, %v70
    %v120 = vand.u32 2147483647, %v71
    %v121 = vand.u32 2147483647, %v72
    %v122 = vand.u32 2147483647, %v73
    %v123 = vand.u32 2147483647, %v74
    %v124 = vand.u32 2147483647, %v75
    %v125 = vsub.f32 0.0, %v101
    %v126 = vsub.f32 0.0, %v102
    %v127 = vsub.f32 0.0, %v103
    %v128 = vsub.f32 0.0, %v104
    %v129 = vsub.f32 0.0, %v105
    %v130 = vsub.f32 0.0, %v106
    %v131 = vsub.f32 0.0, %v107
    %v132 = vsub.f32 0.0, %v108
    %v133 = vsub.f32 0.0, %v109
    %v134 = vsub.f32 0.0, %v110
    %v135 = vsub.f32 0.0, %v111
    %v136 = vsub.f32 0.0, %v112
    %v137 = vsub.f32 0.0, %v113
    %v138 = vsub.f32 0.0, %v114
    %v139 = vsub.f32 0.0, %v115
    %v140 = vsub.f32 0.0, %v116
    %v141 = vsub.f32 0.0, %v117
    %v142 = vsub.f32 0.0, %v118
    %v143 = vsub.f32 0.0, %v119
    %v144 = vsub.f32 0.0, %v120
    %v145 = vsub.f32 0.0, %v121
    %v146 = vsub.f32 0.0, %v122
    %v147 = vsub.f32 0.0, %v123
    %v148 = vsub.f32 0.0, %v124
    %v149 = vmul.f32 %v125, 1.442695
    %v150 = vpow.pop %v149
    %v151 = vmul.f32 %v126, 1.442695
    %v152 = vpow.pop %v151
    %v153 = vmul.f32 %v127, 1.442695
    %v154 = vpow.pop %v153
    %v155 = vmul.f32 %v128, 1.442695
    %v156 = vpow.pop %v155
    %v157 = vmul.f32 %v129, 1.442695
    %v158 = vpow.pop %v157
    %v159 = vmul.f32 %v130, 1.442695
    %v160 = vpow.pop %v159
    %v161 = vmul.f32 %v131, 1.442695
    %v162 = vpow.pop %v161
    %v163 = vmul.f32 %v132, 1.442695
    %v164 = vpow.pop %v163
    %v165 = vmul.f32 %v133, 1.442695
    %v166 = vpow.pop %v165
    %v167 = vmul.f32 %v134, 1.442695
    %v168 = vpow.pop %v167
    %v169 = vmul.f32 %v135, 1.442695
    %v170 = vpow.pop %v169
    %v171 = vmul.f32 %v136, 1.442695
    %v172 = vpow.pop %v171
    %v173 = vmul.f32 %v137, 1.442695
    %v174 = vpow.pop %v173
    %v175 = vmul.f32 %v138, 1.442695
    %v176 = vpow.pop %v175
    %v177 = vmul.f32 %v139, 1.442695
    %v178 = vpow.pop %v177
    %v179 = vmul.f32 %v140, 1.442695
    %v180 = vpow.pop %v179
    %v181 = vmul.f32 %v141, 1.442695
    %v182 = vpow.pop %v181
    %v183 = vmul.f32 %v142, 1.442695
    %v184 = vpow.pop %v183
    %v185 = vmul.f32 %v143, 1.442695
    %v186 = vpow.pop %v185
    %v187 = vmul.f32 %v144, 1.442695
    %v188 = vpow.pop %v187
    %v189 = vmul.f32 %v145, 1.442695
    %v190 = vpow.pop %v189
    %v191 = vmul.f32 %v146, 1.442695
    %v192 = vpow.pop %v191
    %v193 = vmul.f32 %v147, 1.442695
    %v194 = vpow.pop %v193
    %v195 = vmul.f32 %v148, 1.442695
    %v196 = vpow.pop %v195
    %v197 = vadd.f32 %v150, 1.0
    %v198 = vlog2.pop %v197
    %v199 = vmul.f32 %v198, 0.6931472
    %v200 = vmul.f32 -0.5, %v150
    %v201 = vadd.f32 %v200, 1.0
    %v202 = vmul.f32 %v201, %v150
    %v203 = vand.u32 2147483647, %v150
    %vm204 = vcmp.lt.f32.partialorder %v203, 0.0004427343
    %v205 = vsel %vm204, %v202, %v199
    %v206 = vadd.f32 %v152, 1.0
    %v207 = vlog2.pop %v206
    %v208 = vmul.f32 %v207, 0.6931472
    %v209 = vmul.f32 -0.5, %v152
    %v210 = vadd.f32 %v209, 1.0
    %v211 = vmul.f32 %v210, %v152
    %v212 = vand.u32 2147483647, %v152
    %vm213 = vcmp.lt.f32.partialorder %v212, 0.0004427343
    %v214 = vsel %vm213, %v211, %v208
    %v215 = vadd.f32 %v154, 1.0
    %v216 = vlog2.pop %v215
    %v217 = vmul.f32 %v216, 0.6931472
    %v218 = vmul.f32 -0.5, %v154
    %v219 = vadd.f32 %v218, 1.0
    %v220 = vmul.f32 %v219, %v154
    %v221 = vand.u32 2147483647, %v154
    %vm222 = vcmp.lt.f32.partialorder %v221, 0.0004427343
    %v223 = vsel %vm222, %v220, %v217
    %v224 = vadd.f32 %v156, 1.0
    %v225 = vlog2.pop %v224
    %v226 = vmul.f32 %v225, 0.6931472
    %v227 = vmul.f32 -0.5, %v156
    %v228 = vadd.f32 %v227, 1.0
    %v229 = vmul.f32 %v228, %v156
    %v230 = vand.u32 2147483647, %v156
    %vm231 = vcmp.lt.f32.partialorder %v230, 0.0004427343
    %v232 = vsel %vm231, %v229, %v226
    %v233 = vadd.f32 %v158, 1.0
    %v234 = vlog2.pop %v233
    %v235 = vmul.f32 %v234, 0.6931472
    %v236 = vmul.f32 -0.5, %v158
    %v237 = vadd.f32 %v236, 1.0
    %v238 = vmul.f32 %v237, %v158
    %v239 = vand.u32 2147483647, %v158
    %vm240 = vcmp.lt.f32.partialorder %v239, 0.0004427343
    %v241 = vsel %vm240, %v238, %v235
    %v242 = vadd.f32 %v160, 1.0
    %v243 = vlog2.pop %v242
    %v244 = vmul.f32 %v243, 0.6931472
    %v245 = vmul.f32 -0.5, %v160
    %v246 = vadd.f32 %v245, 1.0
    %v247 = vmul.f32 %v246, %v160
    %v248 = vand.u32 2147483647, %v160
    %vm249 = vcmp.lt.f32.partialorder %v248, 0.0004427343
    %v250 = vsel %vm249, %v247, %v244
    %v251 = vadd.f32 %v162, 1.0
    %v252 = vlog2.pop %v251
    %v253 = vmul.f32 %v252, 0.6931472
    %v254 = vmul.f32 -0.5, %v162
    %v255 = vadd.f32 %v254, 1.0
    %v256 = vmul.f32 %v255, %v162
    %v257 = vand.u32 2147483647, %v162
    %vm258 = vcmp.lt.f32.partialorder %v257, 0.0004427343
    %v259 = vsel %vm258, %v256, %v253
    %v260 = vadd.f32 %v164, 1.0
    %v261 = vlog2.pop %v260
    %v262 = vmul.f32 %v261, 0.6931472
    %v263 = vmul.f32 -0.5, %v164
    %v264 = vadd.f32 %v263, 1.0
    %v265 = vmul.f32 %v264, %v164
    %v266 = vand.u32 2147483647, %v164
    %vm267 = vcmp.lt.f32.partialorder %v266, 0.0004427343
    %v268 = vsel %vm267, %v265, %v262
    %v269 = vadd.f32 %v166, 1.0
    %v270 = vlog2.pop %v269
    %v271 = vmul.f32 %v270, 0.6931472
    %v272 = vmul.f32 -0.5, %v166
    %v273 = vadd.f32 %v272, 1.0
    %v274 = vmul.f32 %v273, %v166
    %v275 = vand.u32 2147483647, %v166
    %vm276 = vcmp.lt.f32.partialorder %v275, 0.0004427343
    %v277 = vsel %vm276, %v274, %v271
    %v278 = vadd.f32 %v168, 1.0
    %v279 = vlog2.pop %v278
    %v280 = vmul.f32 %v279, 0.6931472
    %v281 = vmul.f32 -0.5, %v168
    %v282 = vadd.f32 %v281, 1.0
    %v283 = vmul.f32 %v282, %v168
    %v284 = vand.u32 2147483647, %v168
    %vm285 = vcmp.lt.f32.partialorder %v284, 0.0004427343
    %v286 = vsel %vm285, %v283, %v280
    %v287 = vadd.f32 %v170, 1.0
    %v288 = vlog2.pop %v287
    %v289 = vmul.f32 %v288, 0.6931472
    %v290 = vmul.f32 -0.5, %v170
    %v291 = vadd.f32 %v290, 1.0
    %v292 = vmul.f32 %v291, %v170
    %v293 = vand.u32 2147483647, %v170
    %vm294 = vcmp.lt.f32.partialorder %v293, 0.0004427343
    %v295 = vsel %vm294, %v292, %v289
    %v296 = vadd.f32 %v172, 1.0
    %v297 = vlog2.pop %v296
    %v298 = vmul.f32 %v297, 0.6931472
    %v299 = vmul.f32 -0.5, %v172
    %v300 = vadd.f32 %v299, 1.0
    %v301 = vmul.f32 %v300, %v172
    %v302 = vand.u32 2147483647, %v172
    %vm303 = vcmp.lt.f32.partialorder %v302, 0.0004427343
    %v304 = vsel %vm303, %v301, %v298
    %v305 = vadd.f32 %v174, 1.0
    %v306 = vlog2.pop %v305
    %v307 = vmul.f32 %v306, 0.6931472
    %v308 = vmul.f32 -0.5, %v174
    %v309 = vadd.f32 %v308, 1.0
    %v310 = vmul.f32 %v309, %v174
    %v311 = vand.u32 2147483647, %v174
    %vm312 = vcmp.lt.f32.partialorder %v311, 0.0004427343
    %v313 = vsel %vm312, %v310, %v307
    %v314 = vadd.f32 %v176, 1.0
    %v315 = vlog2.pop %v314
    %v316 = vmul.f32 %v315, 0.6931472
    %v317 = vmul.f32 -0.5, %v176
    %v318 = vadd.f32 %v317, 1.0
    %v319 = vmul.f32 %v318, %v176
    %v320 = vand.u32 2147483647, %v176
    %vm321 = vcmp.lt.f32.partialorder %v320, 0.0004427343
    %v322 = vsel %vm321, %v319, %v316
    %v323 = vadd.f32 %v178, 1.0
    %v324 = vlog2.pop %v323
    %v325 = vmul.f32 %v324, 0.6931472
    %v326 = vmul.f32 -0.5, %v178
    %v327 = vadd.f32 %v326, 1.0
    %v328 = vmul.f32 %v327, %v178
    %v329 = vand.u32 2147483647, %v178
    %vm330 = vcmp.lt.f32.partialorder %v329, 0.0004427343
    %v331 = vsel %vm330, %v328, %v325
    %v332 = vadd.f32 %v180, 1.0
    %v333 = vlog2.pop %v332
    %v334 = vmul.f32 %v333, 0.6931472
    %v335 = vmul.f32 -0.5, %v180
    %v336 = vadd.f32 %v335, 1.0
    %v337 = vmul.f32 %v336, %v180
    %v338 = vand.u32 2147483647, %v180
    %vm339 = vcmp.lt.f32.partialorder %v338, 0.0004427343
    %v340 = vsel %vm339, %v337, %v334
    %v341 = vadd.f32 %v182, 1.0
    %v342 = vlog2.pop %v341
    %v343 = vmul.f32 %v342, 0.6931472
    %v344 = vmul.f32 -0.5, %v182
    %v345 = vadd.f32 %v344, 1.0
    %v346 = vmul.f32 %v345, %v182
    %v347 = vand.u32 2147483647, %v182
    %vm348 = vcmp.lt.f32.partialorder %v347, 0.0004427343
    %v349 = vsel %vm348, %v346, %v343
    %v350 = vadd.f32 %v184, 1.0
    %v351 = vlog2.pop %v350
    %v352 = vmul.f32 %v351, 0.6931472
    %v353 = vmul.f32 -0.5, %v184
    %v354 = vadd.f32 %v353, 1.0
    %v355 = vmul.f32 %v354, %v184
    %v356 = vand.u32 2147483647, %v184
    %vm357 = vcmp.lt.f32.partialorder %v356, 0.0004427343
    %v358 = vsel %vm357, %v355, %v352
    %v359 = vadd.f32 %v186, 1.0
    %v360 = vlog2.pop %v359
    %v361 = vmul.f32 %v360, 0.6931472
    %v362 = vmul.f32 -0.5, %v186
    %v363 = vadd.f32 %v362, 1.0
    %v364 = vmul.f32 %v363, %v186
    %v365 = vand.u32 2147483647, %v186
    %vm366 = vcmp.lt.f32.partialorder %v365, 0.0004427343
    %v367 = vsel %vm366, %v364, %v361
    %v368 = vadd.f32 %v188, 1.0
    %v369 = vlog2.pop %v368
    %v370 = vmul.f32 %v369, 0.6931472
    %v371 = vmul.f32 -0.5, %v188
    %v372 = vadd.f32 %v371, 1.0
    %v373 = vmul.f32 %v372, %v188
    %v374 = vand.u32 2147483647, %v188
    %vm375 = vcmp.lt.f32.partialorder %v374, 0.0004427343
    %v376 = vsel %vm375, %v373, %v370
    %v377 = vadd.f32 %v190, 1.0
    %v378 = vlog2.pop %v377
    %v379 = vmul.f32 %v378, 0.6931472
    %v380 = vmul.f32 -0.5, %v190
    %v381 = vadd.f32 %v380, 1.0
    %v382 = vmul.f32 %v381, %v190
    %v383 = vand.u32 2147483647, %v190
    %vm384 = vcmp.lt.f32.partialorder %v383, 0.0004427343
    %v385 = vsel %vm384, %v382, %v379
    %v386 = vadd.f32 %v192, 1.0
    %v387 = vlog2.pop %v386
    %v388 = vmul.f32 %v387, 0.6931472
    %v389 = vmul.f32 -0.5, %v192
    %v390 = vadd.f32 %v389, 1.0
    %v391 = vmul.f32 %v390, %v192
    %v392 = vand.u32 2147483647, %v192
    %vm393 = vcmp.lt.f32.partialorder %v392, 0.0004427343
    %v394 = vsel %vm393, %v391, %v388
    %v395 = vadd.f32 %v194, 1.0
    %v396 = vlog2.pop %v395
    %v397 = vmul.f32 %v396, 0.6931472
    %v398 = vmul.f32 -0.5, %v194
    %v399 = vadd.f32 %v398, 1.0
    %v400 = vmul.f32 %v399, %v194
    %v401 = vand.u32 2147483647, %v194
    %vm402 = vcmp.lt.f32.partialorder %v401, 0.0004427343
    %v403 = vsel %vm402, %v400, %v397
    %v404 = vadd.f32 %v196, 1.0
    %v405 = vlog2.pop %v404
    %v406 = vmul.f32 %v405, 0.6931472
    %v407 = vmul.f32 -0.5, %v196
    %v408 = vadd.f32 %v407, 1.0
    %v409 = vmul.f32 %v408, %v196
    %v410 = vand.u32 2147483647, %v196
    %vm411 = vcmp.lt.f32.partialorder %v410, 0.0004427343
    %v412 = vsel %vm411, %v409, %v406
    %v413 = vsub.f32 0.0, %v52
    %v414 = vsub.f32 0.0, %v53
    %v415 = vsub.f32 0.0, %v54
    %v416 = vsub.f32 0.0, %v55
    %v417 = vsub.f32 0.0, %v56
    %v418 = vsub.f32 0.0, %v57
    %v419 = vsub.f32 0.0, %v58
    %v420 = vsub.f32 0.0, %v59
    %v421 = vsub.f32 0.0, %v60
    %v422 = vsub.f32 0.0, %v61
    %v423 = vsub.f32 0.0, %v62
    %v424 = vsub.f32 0.0, %v63
    %v425 = vsub.f32 0.0, %v64
    %v426 = vsub.f32 0.0, %v65
    %v427 = vsub.f32 0.0, %v66
    %v428 = vsub.f32 0.0, %v67
    %v429 = vsub.f32 0.0, %v68
    %v430 = vsub.f32 0.0, %v69
    %v431 = vsub.f32 0.0, %v70
    %v432 = vsub.f32 0.0, %v71
    %v433 = vsub.f32 0.0, %v72
    %v434 = vsub.f32 0.0, %v73
    %v435 = vsub.f32 0.0, %v74
    %v436 = vsub.f32 0.0, %v75
    %v437 = vmax.f32 %v413, 0.0
    %v438 = vmax.f32 %v414, 0.0
    %v439 = vmax.f32 %v415, 0.0
    %v440 = vmax.f32 %v416, 0.0
    %v441 = vmax.f32 %v417, 0.0
    %v442 = vmax.f32 %v418, 0.0
    %v443 = vmax.f32 %v419, 0.0
    %v444 = vmax.f32 %v420, 0.0
    %v445 = vmax.f32 %v421, 0.0
    %v446 = vmax.f32 %v422, 0.0
    %v447 = vmax.f32 %v423, 0.0
    %v448 = vmax.f32 %v424, 0.0
    %v449 = vmax.f32 %v425, 0.0
    %v450 = vmax.f32 %v426, 0.0
    %v451 = vmax.f32 %v427, 0.0
    %v452 = vmax.f32 %v428, 0.0
    %v453 = vmax.f32 %v429, 0.0
    %v454 = vmax.f32 %v430, 0.0
    %v455 = vmax.f32 %v431, 0.0
    %v456 = vmax.f32 %v432, 0.0
    %v457 = vmax.f32 %v433, 0.0
    %v458 = vmax.f32 %v434, 0.0
    %v459 = vmax.f32 %v435, 0.0
    %v460 = vmax.f32 %v436, 0.0
    %v461 = vadd.f32 %v205, %v437
    %v462 = vadd.f32 %v214, %v438
    %v463 = vadd.f32 %v223, %v439
    %v464 = vadd.f32 %v232, %v440
    %v465 = vadd.f32 %v241, %v441
    %v466 = vadd.f32 %v250, %v442
    %v467 = vadd.f32 %v259, %v443
    %v468 = vadd.f32 %v268, %v444
    %v469 = vadd.f32 %v277, %v445
    %v470 = vadd.f32 %v286, %v446
    %v471 = vadd.f32 %v295, %v447
    %v472 = vadd.f32 %v304, %v448
    %v473 = vadd.f32 %v313, %v449
    %v474 = vadd.f32 %v322, %v450
    %v475 = vadd.f32 %v331, %v451
    %v476 = vadd.f32 %v340, %v452
    %v477 = vadd.f32 %v349, %v453
    %v478 = vadd.f32 %v358, %v454
    %v479 = vadd.f32 %v367, %v455
    %v480 = vadd.f32 %v376, %v456
    %v481 = vadd.f32 %v385, %v457
    %v482 = vadd.f32 %v394, %v458
    %v483 = vadd.f32 %v403, %v459
    %v484 = vadd.f32 %v412, %v460
    %v485 = vstv %s100
    %v486 = vmul.f32 %v485, %v76
    %v487 = vmul.f32 %v485, %v77
    %v488 = vmul.f32 %v485, %v78
    %v489 = vmul.f32 %v485, %v79
    %v490 = vmul.f32 %v485, %v80
    %v491 = vmul.f32 %v485, %v81
    %v492 = vmul.f32 %v485, %v82
    %v493 = vmul.f32 %v485, %v83
    %v494 = vmul.f32 %v485, %v84
    %v495 = vmul.f32 %v485, %v85
    %v496 = vmul.f32 %v485, %v86
    %v497 = vmul.f32 %v485, %v87
    %v498 = vmul.f32 %v485, %v88
    %v499 = vmul.f32 %v485, %v89
    %v500 = vmul.f32 %v485, %v90
    %v501 = vmul.f32 %v485, %v91
    %v502 = vmul.f32 %v485, %v92
    %v503 = vmul.f32 %v485, %v93
    %v504 = vmul.f32 %v485, %v94
    %v505 = vmul.f32 %v485, %v95
    %v506 = vmul.f32 %v485, %v96
    %v507 = vmul.f32 %v485, %v97
    %v508 = vmul.f32 %v485, %v98
    %v509 = vmul.f32 %v485, %v99
    %v510 = vmul.f32 %v486, %v461
    %v511 = vmul.f32 %v487, %v462
    %v512 = vmul.f32 %v488, %v463
    %v513 = vmul.f32 %v489, %v464
    %v514 = vmul.f32 %v490, %v465
    %v515 = vmul.f32 %v491, %v466
    %v516 = vmul.f32 %v492, %v467
    %v517 = vmul.f32 %v493, %v468
    %v518 = vmul.f32 %v494, %v469
    %v519 = vmul.f32 %v495, %v470
    %v520 = vmul.f32 %v496, %v471
    %v521 = vmul.f32 %v497, %v472
    %v522 = vmul.f32 %v498, %v473
    %v523 = vmul.f32 %v499, %v474
    %v524 = vmul.f32 %v500, %v475
    %v525 = vmul.f32 %v501, %v476
    %v526 = vmul.f32 %v502, %v477
    %v527 = vmul.f32 %v503, %v478
    %v528 = vmul.f32 %v504, %v479
    %v529 = vmul.f32 %v505, %v480
    %v530 = vmul.f32 %v506, %v481
    %v531 = vmul.f32 %v507, %v482
    %v532 = vmul.f32 %v508, %v483
    %v533 = vmul.f32 %v509, %v484
    %v534 = vsub.f32 1.0, %v76
    %v535 = vsub.f32 1.0, %v77
    %v536 = vsub.f32 1.0, %v78
    %v537 = vsub.f32 1.0, %v79
    %v538 = vsub.f32 1.0, %v80
    %v539 = vsub.f32 1.0, %v81
    %v540 = vsub.f32 1.0, %v82
    %v541 = vsub.f32 1.0, %v83
    %v542 = vsub.f32 1.0, %v84
    %v543 = vsub.f32 1.0, %v85
    %v544 = vsub.f32 1.0, %v86
    %v545 = vsub.f32 1.0, %v87
    %v546 = vsub.f32 1.0, %v88
    %v547 = vsub.f32 1.0, %v89
    %v548 = vsub.f32 1.0, %v90
    %v549 = vsub.f32 1.0, %v91
    %v550 = vsub.f32 1.0, %v92
    %v551 = vsub.f32 1.0, %v93
    %v552 = vsub.f32 1.0, %v94
    %v553 = vsub.f32 1.0, %v95
    %v554 = vsub.f32 1.0, %v96
    %v555 = vsub.f32 1.0, %v97
    %v556 = vsub.f32 1.0, %v98
    %v557 = vsub.f32 1.0, %v99
    %v558 = vadd.f32 %v52, %v461
    %v559 = vadd.f32 %v53, %v462
    %v560 = vadd.f32 %v54, %v463
    %v561 = vadd.f32 %v55, %v464
    %v562 = vadd.f32 %v56, %v465
    %v563 = vadd.f32 %v57, %v466
    %v564 = vadd.f32 %v58, %v467
    %v565 = vadd.f32 %v59, %v468
    %v566 = vadd.f32 %v60, %v469
    %v567 = vadd.f32 %v61, %v470
    %v568 = vadd.f32 %v62, %v471
    %v569 = vadd.f32 %v63, %v472
    %v570 = vadd.f32 %v64, %v473
    %v571 = vadd.f32 %v65, %v474
    %v572 = vadd.f32 %v66, %v475
    %v573 = vadd.f32 %v67, %v476
    %v574 = vadd.f32 %v68, %v477
    %v575 = vadd.f32 %v69, %v478
    %v576 = vadd.f32 %v70, %v479
    %v577 = vadd.f32 %v71, %v480
    %v578 = vadd.f32 %v72, %v481
    %v579 = vadd.f32 %v73, %v482
    %v580 = vadd.f32 %v74, %v483
    %v581 = vadd.f32 %v75, %v484
    %v582 = vmul.f32 %v534, %v558
    %v583 = vmul.f32 %v535, %v559
    %v584 = vmul.f32 %v536, %v560
    %v585 = vmul.f32 %v537, %v561
    %v586 = vmul.f32 %v538, %v562
    %v587 = vmul.f32 %v539, %v563
    %v588 = vmul.f32 %v540, %v564
    %v589 = vmul.f32 %v541, %v565
    %v590 = vmul.f32 %v542, %v566
    %v591 = vmul.f32 %v543, %v567
    %v592 = vmul.f32 %v544, %v568
    %v593 = vmul.f32 %v545, %v569
    %v594 = vmul.f32 %v546, %v570
    %v595 = vmul.f32 %v547, %v571
    %v596 = vmul.f32 %v548, %v572
    %v597 = vmul.f32 %v549, %v573
    %v598 = vmul.f32 %v550, %v574
    %v599 = vmul.f32 %v551, %v575
    %v600 = vmul.f32 %v552, %v576
    %v601 = vmul.f32 %v553, %v577
    %v602 = vmul.f32 %v554, %v578
    %v603 = vmul.f32 %v555, %v579
    %v604 = vmul.f32 %v556, %v580
    %v605 = vmul.f32 %v557, %v581
    %v606 = vadd.f32 %v510, %v582
    %v607 = vadd.f32 %v511, %v583
    %v608 = vadd.f32 %v512, %v584
    %v609 = vadd.f32 %v513, %v585
    %v610 = vadd.f32 %v514, %v586
    %v611 = vadd.f32 %v515, %v587
    %v612 = vadd.f32 %v516, %v588
    %v613 = vadd.f32 %v517, %v589
    %v614 = vadd.f32 %v518, %v590
    %v615 = vadd.f32 %v519, %v591
    %v616 = vadd.f32 %v520, %v592
    %v617 = vadd.f32 %v521, %v593
    %v618 = vadd.f32 %v522, %v594
    %v619 = vadd.f32 %v523, %v595
    %v620 = vadd.f32 %v524, %v596
    %v621 = vadd.f32 %v525, %v597
    %v622 = vadd.f32 %v526, %v598
    %v623 = vadd.f32 %v527, %v599
    %v624 = vadd.f32 %v528, %v600
    %v625 = vadd.f32 %v529, %v601
    %v626 = vadd.f32 %v530, %v602
    %v627 = vadd.f32 %v531, %v603
    %v628 = vadd.f32 %v532, %v604
    %v629 = vadd.f32 %v533, %v605
    %v630 = vsub.f32 0.0, %v606
    %v631 = vsub.f32 0.0, %v607
    %v632 = vsub.f32 0.0, %v608
    %v633 = vsub.f32 0.0, %v609
    %v634 = vsub.f32 0.0, %v610
    %v635 = vsub.f32 0.0, %v611
    %v636 = vsub.f32 0.0, %v612
    %v637 = vsub.f32 0.0, %v613
    %v638 = vsub.f32 0.0, %v614
    %v639 = vsub.f32 0.0, %v615
    %v640 = vsub.f32 0.0, %v616
    %v641 = vsub.f32 0.0, %v617
    %v642 = vsub.f32 0.0, %v618
    %v643 = vsub.f32 0.0, %v619
    %v644 = vsub.f32 0.0, %v620
    %v645 = vsub.f32 0.0, %v621
    %v646 = vsub.f32 0.0, %v622
    %v647 = vsub.f32 0.0, %v623
    %v648 = vsub.f32 0.0, %v624
    %v649 = vsub.f32 0.0, %v625
    %v650 = vsub.f32 0.0, %v626
    %v651 = vsub.f32 0.0, %v627
    %v652 = vsub.f32 0.0, %v628
    %v653 = vsub.f32 0.0, %v629
    %v654 = vmul.f32 %v630, 1.442695
    %v655 = vpow.pop %v654
    %v656 = vmul.f32 %v631, 1.442695
    %v657 = vpow.pop %v656
    %v658 = vmul.f32 %v632, 1.442695
    %v659 = vpow.pop %v658
    %v660 = vmul.f32 %v633, 1.442695
    %v661 = vpow.pop %v660
    %v662 = vmul.f32 %v634, 1.442695
    %v663 = vpow.pop %v662
    %v664 = vmul.f32 %v635, 1.442695
    %v665 = vpow.pop %v664
    %v666 = vmul.f32 %v636, 1.442695
    %v667 = vpow.pop %v666
    %v668 = vmul.f32 %v637, 1.442695
    %v669 = vpow.pop %v668
    %v670 = vmul.f32 %v638, 1.442695
    %v671 = vpow.pop %v670
    %v672 = vmul.f32 %v639, 1.442695
    %v673 = vpow.pop %v672
    %v674 = vmul.f32 %v640, 1.442695
    %v675 = vpow.pop %v674
    %v676 = vmul.f32 %v641, 1.442695
    %v677 = vpow.pop %v676
    %v678 = vmul.f32 %v642, 1.442695
    %v679 = vpow.pop %v678
    %v680 = vmul.f32 %v643, 1.442695
    %v681 = vpow.pop %v680
    %v682 = vmul.f32 %v644, 1.442695
    %v683 = vpow.pop %v682
    %v684 = vmul.f32 %v645, 1.442695
    %v685 = vpow.pop %v684
    %v686 = vmul.f32 %v646, 1.442695
    %v687 = vpow.pop %v686
    %v688 = vmul.f32 %v647, 1.442695
    %v689 = vpow.pop %v688
    %v690 = vmul.f32 %v648, 1.442695
    %v691 = vpow.pop %v690
    %v692 = vmul.f32 %v649, 1.442695
    %v693 = vpow.pop %v692
    %v694 = vmul.f32 %v650, 1.442695
    %v695 = vpow.pop %v694
    %v696 = vmul.f32 %v651, 1.442695
    %v697 = vpow.pop %v696
    %v698 = vmul.f32 %v652, 1.442695
    %v699 = vpow.pop %v698
    %v700 = vmul.f32 %v653, 1.442695
    %v701 = vpow.pop %v700
    %v702 = vsub.f32 1.0, %v655
    %v703 = vsub.f32 1.0, %v657
    %v704 = vsub.f32 1.0, %v659
    %v705 = vsub.f32 1.0, %v661
    %v706 = vsub.f32 1.0, %v663
    %v707 = vsub.f32 1.0, %v665
    %v708 = vsub.f32 1.0, %v667
    %v709 = vsub.f32 1.0, %v669
    %v710 = vsub.f32 1.0, %v671
    %v711 = vsub.f32 1.0, %v673
    %v712 = vsub.f32 1.0, %v675
    %v713 = vsub.f32 1.0, %v677
    %v714 = vsub.f32 1.0, %v679
    %v715 = vsub.f32 1.0, %v681
    %v716 = vsub.f32 1.0, %v683
    %v717 = vsub.f32 1.0, %v685
    %v718 = vsub.f32 1.0, %v687
    %v719 = vsub.f32 1.0, %v689
    %v720 = vsub.f32 1.0, %v691
    %v721 = vsub.f32 1.0, %v693
    %v722 = vsub.f32 1.0, %v695
    %v723 = vsub.f32 1.0, %v697
    %v724 = vsub.f32 1.0, %v699
    %v725 = vsub.f32 1.0, %v701
    %v726 = vmul.f32 %v702, %v702
    %v727 = vmul.f32 %v703, %v703
    %v728 = vmul.f32 %v704, %v704
    %v729 = vmul.f32 %v705, %v705
    %v730 = vmul.f32 %v706, %v706
    %v731 = vmul.f32 %v707, %v707
    %v732 = vmul.f32 %v708, %v708
    %v733 = vmul.f32 %v709, %v709
    %v734 = vmul.f32 %v710, %v710
    %v735 = vmul.f32 %v711, %v711
    %v736 = vmul.f32 %v712, %v712
    %v737 = vmul.f32 %v713, %v713
    %v738 = vmul.f32 %v714, %v714
    %v739 = vmul.f32 %v715, %v715
    %v740 = vmul.f32 %v716, %v716
    %v741 = vmul.f32 %v717, %v717
    %v742 = vmul.f32 %v718, %v718
    %v743 = vmul.f32 %v719, %v719
    %v744 = vmul.f32 %v720, %v720
    %v745 = vmul.f32 %v721, %v721
    %v746 = vmul.f32 %v722, %v722
    %v747 = vmul.f32 %v723, %v723
    %v748 = vmul.f32 %v724, %v724
    %v749 = vmul.f32 %v725, %v725
    %v750 = vmul.f32 %v726, %v606
    %v751 = vmul.f32 %v727, %v607
    %v752 = vmul.f32 %v728, %v608
    %v753 = vmul.f32 %v729, %v609
    %v754 = vmul.f32 %v730, %v610
    %v755 = vmul.f32 %v731, %v611
    %v756 = vmul.f32 %v732, %v612
    %v757 = vmul.f32 %v733, %v613
    %v758 = vmul.f32 %v734, %v614
    %v759 = vmul.f32 %v735, %v615
    %v760 = vmul.f32 %v736, %v616
    %v761 = vmul.f32 %v737, %v617
    %v762 = vmul.f32 %v738, %v618
    %v763 = vmul.f32 %v739, %v619
    %v764 = vmul.f32 %v740, %v620
    %v765 = vmul.f32 %v741, %v621
    %v766 = vmul.f32 %v742, %v622
    %v767 = vmul.f32 %v743, %v623
    %v768 = vmul.f32 %v744, %v624
    %v769 = vmul.f32 %v745, %v625
    %v770 = vmul.f32 %v746, %v626
    %v771 = vmul.f32 %v747, %v627
    %v772 = vmul.f32 %v748, %v628
    %v773 = vmul.f32 %v749, %v629
    %v774 = vld [vmem:[#allocation2] sm:$0xff]
    %v775 = vld [vmem:[#allocation2 + $0x8] sm:$0xff]
    %v776 = vld [vmem:[#allocation2 + $0x10] sm:$0xff]
    %v777 = vld [vmem:[#allocation2 + $0x18] sm:$0xff]
    %v778 = vadd.f32 %v750, %v754
    %v779 = vadd.f32 %v778, %v758
    %v780 = vadd.f32 %v779, %v762
    %v781 = vadd.f32 %v780, %v766
    %v782 = vadd.f32 %v781, %v770
    %v783 = vadd.f32 %v751, %v755
    %v784 = vadd.f32 %v783, %v759
    %v785 = vadd.f32 %v784, %v763
    %v786 = vadd.f32 %v785, %v767
    %v787 = vadd.f32 %v786, %v771
    %v788 = vadd.f32 %v752, %v756
    %v789 = vadd.f32 %v788, %v760
    %v790 = vadd.f32 %v789, %v764
    %v791 = vadd.f32 %v790, %v768
    %v792 = vadd.f32 %v791, %v772
    %v793 = vadd.f32 %v753, %v757
    %v794 = vadd.f32 %v793, %v761
    %v795 = vadd.f32 %v794, %v765
    %v796 = vadd.f32 %v795, %v769
    %v797 = vadd.f32 %v796, %v773
    %v798 = vadd.f32 %v774, %v782
    %v799 = vadd.f32 %v775, %v787
    %v800 = vadd.f32 %v776, %v792
    %v801 = vadd.f32 %v777, %v797
    %802 = vst [vmem:[#allocation2] sm:$0xff] %v798
    %803 = vst [vmem:[#allocation2 + $0x8] sm:$0xff] %v799
    %804 = vst [vmem:[#allocation2 + $0x10] sm:$0xff] %v800
    %805 = vst [vmem:[#allocation2 + $0x18] sm:$0xff] %v801
    // Predicated region
    $region26: #{tpu_custom_call.1} parent=1 // pred_check
      %p806 = pneg %p44
    $region27: #{tpu_custom_call.1} parent=1 // pred_check_branch
      %808 = sbr.rel (%p806) target = $region29
    $region28: #{tpu_custom_call.1} parent=1 // pred_region
      %v809 = vld [vmem:[#allocation2] sm:$0xff]
      %v810 = vld [vmem:[#allocation2 + $0x8] sm:$0xff]
      %v811 = vld [vmem:[#allocation2 + $0x10] sm:$0xff]
      %v812 = vld [vmem:[#allocation2 + $0x18] sm:$0xff]
      %v813 = vadd.f32 %v809, %v810
      %v814 = vadd.f32 %v813, %v811
      %v815 = vadd.f32 %v814, %v812
      %816 = vadd.xlane.f32.xlu0 %v815
      %v817 = vpop.xlane.xlu0 %816
      %v818 = vrot.slane %v817, 4
      %v819 = vadd.f32 %v817, %v818
      %v820 = vrot.slane %v819, 2
      %v821 = vadd.f32 %v819, %v820
      %v822 = vrot.slane %v821, 1
      %v823 = vadd.f32 %v821, %v822
      %s824 = vtos %v823
      %v825 = vrcp.pop 24576.0
      %s826 = vtos %v825
      %s827 = smul.f32 %s824, %s826
      %s828 = scalar_lea.smem [#allocation9], 0
      %829 = sst [smem:[%s828]] %s827
    $region29: #{tpu_custom_call.1} parent=1 // pred_fallthru
      _
    // Predicated region
    $region30: #{tpu_custom_call.1} parent=1 // pred_check
      _
    $region31: #{tpu_custom_call.1} parent=1 // pred_check_branch
      %831 = sbr.rel (0) target = $region33
    $region32: #{tpu_custom_call.1} parent=1 // pred_region
      %s833 = ssub.s32 16, 16
      %834 = vsyncadd [#allocation6], %s833
      %837 = dma.smem_to_hbm [#allocation9], 16, %s3, [#allocation6]
    $region33: #{tpu_custom_call.1} parent=1 // pred_fallthru
      _
    // Predicated region
    $region34: #{tpu_custom_call.1} parent=1 // pred_check
      _
    $region35: #{tpu_custom_call.1} parent=1 // pred_check_branch
      %839 = sbr.rel (0) target = $region37
    $region36: #{tpu_custom_call.1} parent=1 // pred_region
      %840 = dma.done [#allocation6], 16
    $region37: #{tpu_custom_call.1} parent=1 // pred_fallthru
      _
    %841 = sfence
    %842 = vsyncpa [#allocation5], 1
    %843 = vsyncpa [#allocation8], 1
    %844 = vsyncpa [#allocation6], 1

</llo_original>
